<compile_context>
chip_gen: v7x
topology: tpu7x:2x2x1
jax: 0.10.0
libtpu: 0.0.40
codegen_flags: <defaults>
</compile_context>

<pallas_src>
import functools

import jax
import jax.numpy as jnp
from jax.experimental import pallas as pl
from jax.experimental.pallas import tpu as pltpu


def _round_up(x, m):
    return ((x + m - 1) // m) * m


# ----------------------------- Pallas kernel ------------------------------ #
def _pos_extraction_kernel(x_ref, w1_ref, b1_ref, w2_ref, b2_ref, o_ref, *,
                           blocks):
    """Fused stack of residual 1x1-conv blocks on a [C, tn] tile of positions.

    x_ref : [C,  tn]       channels (sublanes) x positions (lanes)
    w1_ref: [blocks, Ce, C]  folded conv1+BN1 weights
    b1_ref: [blocks, Ce, 1]  folded conv1+BN1 biases
    w2_ref: [blocks, C, Ce]  folded conv2+BN2 weights
    b2_ref: [blocks, C, 1]   folded conv2+BN2 biases
    o_ref : [C,  tn]
    """
    x = x_ref[...].astype(jnp.float32)
    # `blocks` is a small static count; unrolled Python loop with static
    # weight-slab indices keeps everything visible to the scheduler.
    for k in range(blocks):
        w1 = w1_ref[k]                      # [Ce, C]
        b1 = b1_ref[k]                      # [Ce, 1]
        w2 = w2_ref[k]                      # [C, Ce]
        b2 = b2_ref[k]                      # [C, 1]
        h = jnp.dot(w1, x, preferred_element_type=jnp.float32) + b1
        h = jnp.maximum(h, 0.0)             # ReLU (net1 activation)
        y = jnp.dot(w2, h, preferred_element_type=jnp.float32) + b2
        x = jnp.maximum(y + x, 0.0)         # residual add + final ReLU
    o_ref[...] = x.astype(o_ref.dtype)


# ------------------------------- forward ----------------------------------- #
@functools.partial(jax.jit, static_argnames=("tn",))
def pos_extraction_forward(x_ncw, w1, b1, w2, b2, tn=1024):
    """x_ncw: [B, C, N] (PyTorch Conv1d layout). Returns [B, C, N].

    w1: [blocks, Ce, C], b1: [blocks, Ce, 1], w2: [blocks, C, Ce],
    b2: [blocks, C, 1]  (BN already folded, eval-mode semantics).
    """
    B, C, N = x_ncw.shape
    blocks, Ce, _ = w1.shape

    # Position tile: multiple of 128 lanes, capped by (rounded-up) N.
    tn_eff = min(_round_up(tn, 128), _round_up(N, 128))
    Np = _round_up(N, tn_eff)
    x_pad = x_ncw if Np == N else jnp.pad(x_ncw, ((0, 0), (0, 0), (0, Np - N)))

    grid = (B, Np // tn_eff)
    kernel = functools.partial(_pos_extraction_kernel, blocks=blocks)

    out = pl.pallas_call(
        kernel,
        out_shape=jax.ShapeDtypeStruct((B, C, Np), x_ncw.dtype),
        grid_spec=pltpu.PrefetchScalarGridSpec(
            num_scalar_prefetch=0,
            grid=grid,
            in_specs=[
                # x tile: batch dim squeezed, [C, tn] in the kernel.
                pl.BlockSpec((None, C, tn_eff), lambda b, j: (b, 0, j)),
                # All block weights fully VMEM-resident (tiny: ~blocks*2*C*Ce*4B).
                pl.BlockSpec((blocks, Ce, C), lambda b, j: (0, 0, 0)),
                pl.BlockSpec((blocks, Ce, 1), lambda b, j: (0, 0, 0)),
                pl.BlockSpec((blocks, C, Ce), lambda b, j: (0, 0, 0)),
                pl.BlockSpec((blocks, C, 1), lambda b, j: (0, 0, 0)),
            ],
            out_specs=pl.BlockSpec((None, C, tn_eff), lambda b, j: (b, 0, j)),
        ),
        # Both grid axes independent -> megacore sharding on v7x.
        # VMEM use is ~1-2 MiB even at tn=2048, well under the 32 MiB scoped
        # default on all generations, so no vmem_limit_bytes override needed.
        compiler_params=pltpu.CompilerParams(
            dimension_semantics=("parallel", "parallel")),
    )(x_pad, w1, b1, w2, b2)

    return out[:, :, :N] if Np != N else out


# --------------------------- parameter handling ---------------------------- #
def _fold_conv_bn(w, b, gamma, beta, mean, var, eps=1e-5):
    """Fold Conv1d(k=1) weight [Cout, Cin] + bias [Cout] with eval-mode BN.

    Returns (W_f [Cout, Cin], b_f [Cout, 1]) for the NCW-layout kernel
    (y = W_f @ x + b_f).
    """
    s = gamma / jnp.sqrt(var + eps)                      # [Cout]
    w_f = w * s[:, None]                                 # [Cout, Cin]
    b_f = s * (b - mean) + beta                          # [Cout]
    return w_f, b_f[:, None]


def init_pos_extraction_params(key, channels, blocks=1, res_expansion=1.0):
    """Deterministic synthetic params mirroring PosExtraction.__init__ shapes.

    Returns stacked, BN-folded arrays:
      w1 [blocks, Ce, C], b1 [blocks, Ce, 1], w2 [blocks, C, Ce], b2 [blocks, C, 1]
    """
    ce = int(channels * res_expansion)
    w1s, b1s, w2s, b2s = [], [], [], []
    for _ in range(blocks):
        keys = jax.random.split(key, 13)
        key = keys[0]
        # Conv1d(channels -> ce, k=1): weight [ce, channels, 1] -> [ce, channels]
        w1 = jax.random.normal(keys[1], (ce, channels), jnp.float32) * 0.1
        b1 = jax.random.normal(keys[2], (ce,), jnp.float32) * 0.1
        g1 = 1.0 + 0.1 * jax.random.normal(keys[3], (ce,), jnp.float32)
        be1 = 0.1 * jax.random.normal(keys[4], (ce,), jnp.float32)
        m1 = 0.1 * jax.random.normal(keys[5], (ce,), jnp.float32)
        v1 = jnp.abs(jax.random.normal(keys[6], (ce,), jnp.float32)) + 0.5
        # Conv1d(ce -> channels, k=1)
        w2 = jax.random.normal(keys[7], (channels, ce), jnp.float32) * 0.1
        b2 = jax.random.normal(keys[8], (channels,), jnp.float32) * 0.1
        g2 = 1.0 + 0.1 * jax.random.normal(keys[9], (channels,), jnp.float32)
        be2 = 0.1 * jax.random.normal(keys[10], (channels,), jnp.float32)
        m2 = 0.1 * jax.random.normal(keys[11], (channels,), jnp.float32)
        v2 = jnp.abs(jax.random.normal(keys[12], (channels,), jnp.float32)) + 0.5
        # TODO(synk): PyTorch BatchNorm1d in training mode uses batch stats;
        # here BN is folded with (synthetic) running stats, i.e. eval semantics.
        w1f, b1f = _fold_conv_bn(w1, b1, g1, be1, m1, v1)
        w2f, b2f = _fold_conv_bn(w2, b2, g2, be2, m2, v2)
        w1s.append(w1f); b1s.append(b1f); w2s.append(w2f); b2s.append(b2f)
    return (jnp.stack(w1s), jnp.stack(b1s), jnp.stack(w2s), jnp.stack(b2s))


# ------------------------------ reference ---------------------------------- #
def _reference(x_ncw, w1, b1, w2, b2):
    x = x_ncw.astype(jnp.float32)                        # [B, C, N]
    blocks = w1.shape[0]
    for k in range(blocks):
        h = jnp.einsum("oc,bcn->bon", w1[k], x) + b1[k][None]
        h = jnp.maximum(h, 0.0)
        y = jnp.einsum("co,bon->bcn", w2[k], h) + b2[k][None]
        x = jnp.maximum(y + x, 0.0)
    return x


if __name__ == "__main__":
    B, C, N = 2, 64, 256          # input[b, d, g] with d=channels=64, g=N=256
    blocks = 2

    key = jax.random.PRNGKey(0)
    kx, kp = jax.random.split(key)
    x = jax.random.normal(kx, (B, C, N), jnp.float32)
    w1, b1, w2, b2 = init_pos_extraction_params(kp, channels=C, blocks=blocks,
                                                res_expansion=1.0)

    # f32 activation I/O.
    out = pos_extraction_forward(x, w1, b1, w2, b2, tn=1024)
    out = jax.block_until_ready(out)
    ref = _reference(x, w1, b1, w2, b2)
    assert out.shape == (B, C, N)
    assert jnp.allclose(out, ref, atol=1e-3, rtol=1e-3)

    # bf16 activation I/O (halves HBM traffic; compute stays f32 in-kernel).
    x_bf16 = x.astype(jnp.bfloat16)
    out_bf16 = jax.block_until_ready(
        pos_extraction_forward(x_bf16, w1, b1, w2, b2, tn=1024))
    ref_bf16 = _reference(x_bf16.astype(jnp.float32), w1, b1, w2, b2)
    assert out_bf16.dtype == jnp.bfloat16
    assert jnp.allclose(out_bf16.astype(jnp.float32), ref_bf16,
                        atol=5e-2, rtol=5e-2)

    print("KERNEL_OK")
</pallas_src>

<mosaic_0001>
module attributes {stable_mosaic.version = 11 : i64} {
  func.func @_pos_extraction_kernel(%arg0: i32, %arg1: i32, %arg2: memref<1x64x256xf32, #tpu.memory_space<vmem>>, %arg3: memref<2x64x64xf32, #tpu.memory_space<vmem>>, %arg4: memref<2x64x1xf32, #tpu.memory_space<vmem>>, %arg5: memref<2x64x64xf32, #tpu.memory_space<vmem>>, %arg6: memref<2x64x1xf32, #tpu.memory_space<vmem>>, %arg7: memref<1x64x256xf32, #tpu.memory_space<vmem>>) attributes {dimension_semantics = [#tpu.dimension_semantics<parallel>, #tpu.dimension_semantics<parallel>], iteration_bounds = array<i64: 2, 1>, scalar_prefetch = 0 : i64, scratch_operands = 0 : i64, tpu.core_type = #tpu.core_type<tc>, window_params = [{transform_indices = @transform_0, window_bounds = array<i64: 1, 64, 256>}, {pipeline_mode = #tpu.pipeline_mode<synchronous>, transform_indices = @transform_1, window_bounds = array<i64: 2, 64, 64>}, {pipeline_mode = #tpu.pipeline_mode<synchronous>, transform_indices = @transform_2, window_bounds = array<i64: 2, 64, 1>}, {pipeline_mode = #tpu.pipeline_mode<synchronous>, transform_indices = @transform_3, window_bounds = array<i64: 2, 64, 64>}, {pipeline_mode = #tpu.pipeline_mode<synchronous>, transform_indices = @transform_4, window_bounds = array<i64: 2, 64, 1>}, {transform_indices = @transform_5, window_bounds = array<i64: 1, 64, 256>}]} {
    %c0 = arith.constant 0 : index
    %c0_0 = arith.constant 0 : index
    %c0_1 = arith.constant 0 : index
    %0 = vector.load %arg2[%c0, %c0_0, %c0_1] : memref<1x64x256xf32, #tpu.memory_space<vmem>>, vector<1x64x256xf32>
    %1 = vector.shape_cast %0 : vector<1x64x256xf32> to vector<64x256xf32>
    %c0_2 = arith.constant 0 : index
    %c0_3 = arith.constant 0 : index
    %c0_4 = arith.constant 0 : index
    %2 = vector.load %arg3[%c0_2, %c0_3, %c0_4] : memref<2x64x64xf32, #tpu.memory_space<vmem>>, vector<1x64x64xf32>
    %3 = vector.shape_cast %2 : vector<1x64x64xf32> to vector<64x64xf32>
    %c0_5 = arith.constant 0 : index
    %c0_6 = arith.constant 0 : index
    %c0_7 = arith.constant 0 : index
    %4 = vector.load %arg4[%c0_5, %c0_6, %c0_7] : memref<2x64x1xf32, #tpu.memory_space<vmem>>, vector<1x64x1xf32>
    %5 = vector.shape_cast %4 : vector<1x64x1xf32> to vector<64x1xf32>
    %c0_8 = arith.constant 0 : index
    %c0_9 = arith.constant 0 : index
    %c0_10 = arith.constant 0 : index
    %6 = vector.load %arg5[%c0_8, %c0_9, %c0_10] : memref<2x64x64xf32, #tpu.memory_space<vmem>>, vector<1x64x64xf32>
    %7 = vector.shape_cast %6 : vector<1x64x64xf32> to vector<64x64xf32>
    %c0_11 = arith.constant 0 : index
    %c0_12 = arith.constant 0 : index
    %c0_13 = arith.constant 0 : index
    %8 = vector.load %arg6[%c0_11, %c0_12, %c0_13] : memref<2x64x1xf32, #tpu.memory_space<vmem>>, vector<1x64x1xf32>
    %9 = vector.shape_cast %8 : vector<1x64x1xf32> to vector<64x1xf32>
    %cst = arith.constant dense<0.000000e+00> : vector<64x256xf32>
    %10 = tpu.matmul %3, %1, %cst {dimension_numbers = #tpu.dot_dimension_numbers<[1], [0], [0], [1], [0, 0, 1, 1], [], []>} : vector<64x64xf32>, vector<64x256xf32>, vector<64x256xf32> -> vector<64x256xf32>
    %11 = vector.broadcast %5 : vector<64x1xf32> to vector<64x256xf32>
    %12 = arith.addf %10, %11 : vector<64x256xf32>
    %cst_14 = arith.constant 0.000000e+00 : f32
    %13 = vector.broadcast %cst_14 : f32 to vector<64x256xf32>
    %14 = arith.maximumf %12, %13 : vector<64x256xf32>
    %cst_15 = arith.constant dense<0.000000e+00> : vector<64x256xf32>
    %15 = tpu.matmul %7, %14, %cst_15 {dimension_numbers = #tpu.dot_dimension_numbers<[1], [0], [0], [1], [0, 0, 1, 1], [], []>} : vector<64x64xf32>, vector<64x256xf32>, vector<64x256xf32> -> vector<64x256xf32>
    %16 = vector.broadcast %9 : vector<64x1xf32> to vector<64x256xf32>
    %17 = arith.addf %15, %16 : vector<64x256xf32>
    %18 = arith.addf %17, %1 : vector<64x256xf32>
    %cst_16 = arith.constant 0.000000e+00 : f32
    %19 = vector.broadcast %cst_16 : f32 to vector<64x256xf32>
    %20 = arith.maximumf %18, %19 : vector<64x256xf32>
    %c1 = arith.constant 1 : index
    %c0_17 = arith.constant 0 : index
    %c0_18 = arith.constant 0 : index
    %21 = vector.load %arg3[%c1, %c0_17, %c0_18] : memref<2x64x64xf32, #tpu.memory_space<vmem>>, vector<1x64x64xf32>
    %22 = vector.shape_cast %21 : vector<1x64x64xf32> to vector<64x64xf32>
    %c1_19 = arith.constant 1 : index
    %c0_20 = arith.constant 0 : index
    %c0_21 = arith.constant 0 : index
    %23 = vector.load %arg4[%c1_19, %c0_20, %c0_21] : memref<2x64x1xf32, #tpu.memory_space<vmem>>, vector<1x64x1xf32>
    %24 = vector.shape_cast %23 : vector<1x64x1xf32> to vector<64x1xf32>
    %c1_22 = arith.constant 1 : index
    %c0_23 = arith.constant 0 : index
    %c0_24 = arith.constant 0 : index
    %25 = vector.load %arg5[%c1_22, %c0_23, %c0_24] : memref<2x64x64xf32, #tpu.memory_space<vmem>>, vector<1x64x64xf32>
    %26 = vector.shape_cast %25 : vector<1x64x64xf32> to vector<64x64xf32>
    %c1_25 = arith.constant 1 : index
    %c0_26 = arith.constant 0 : index
    %c0_27 = arith.constant 0 : index
    %27 = vector.load %arg6[%c1_25, %c0_26, %c0_27] : memref<2x64x1xf32, #tpu.memory_space<vmem>>, vector<1x64x1xf32>
    %28 = vector.shape_cast %27 : vector<1x64x1xf32> to vector<64x1xf32>
    %cst_28 = arith.constant dense<0.000000e+00> : vector<64x256xf32>
    %29 = tpu.matmul %22, %20, %cst_28 {dimension_numbers = #tpu.dot_dimension_numbers<[1], [0], [0], [1], [0, 0, 1, 1], [], []>} : vector<64x64xf32>, vector<64x256xf32>, vector<64x256xf32> -> vector<64x256xf32>
    %30 = vector.broadcast %24 : vector<64x1xf32> to vector<64x256xf32>
    %31 = arith.addf %29, %30 : vector<64x256xf32>
    %cst_29 = arith.constant 0.000000e+00 : f32
    %32 = vector.broadcast %cst_29 : f32 to vector<64x256xf32>
    %33 = arith.maximumf %31, %32 : vector<64x256xf32>
    %cst_30 = arith.constant dense<0.000000e+00> : vector<64x256xf32>
    %34 = tpu.matmul %26, %33, %cst_30 {dimension_numbers = #tpu.dot_dimension_numbers<[1], [0], [0], [1], [0, 0, 1, 1], [], []>} : vector<64x64xf32>, vector<64x256xf32>, vector<64x256xf32> -> vector<64x256xf32>
    %35 = vector.broadcast %28 : vector<64x1xf32> to vector<64x256xf32>
    %36 = arith.addf %34, %35 : vector<64x256xf32>
    %37 = arith.addf %36, %20 : vector<64x256xf32>
    %cst_31 = arith.constant 0.000000e+00 : f32
    %38 = vector.broadcast %cst_31 : f32 to vector<64x256xf32>
    %39 = arith.maximumf %37, %38 : vector<64x256xf32>
    %c0_32 = arith.constant 0 : index
    %c0_33 = arith.constant 0 : index
    %c0_34 = arith.constant 0 : index
    %40 = vector.load %arg7[%c0_32, %c0_33, %c0_34] : memref<1x64x256xf32, #tpu.memory_space<vmem>>, vector<1x64x256xf32>
    %41 = vector.shape_cast %40 : vector<1x64x256xf32> to vector<64x256xf32>
    %42 = vector.shape_cast %39 : vector<64x256xf32> to vector<1x64x256xf32>
    tpu.vector_store %arg7[%c0_32, %c0_33, %c0_34], %42 {strides = array<i32>} : memref<1x64x256xf32, #tpu.memory_space<vmem>>, vector<1x64x256xf32>,
    return
  }
  func.func @transform_0(%arg0: i32, %arg1: i32) -> (i32, i32, i32) {
    %c0_i32 = arith.constant 0 : i32
    %c0_i32_0 = arith.constant 0 : i32
    return %arg0, %c0_i32, %arg1 : i32, i32, i32
  }
  func.func @transform_1(%arg0: i32, %arg1: i32) -> (i32, i32, i32) {
    %c0_i32 = arith.constant 0 : i32
    %c0_i32_0 = arith.constant 0 : i32
    %c0_i32_1 = arith.constant 0 : i32
    %c0_i32_2 = arith.constant 0 : i32
    return %c0_i32, %c0_i32_0, %c0_i32_1 : i32, i32, i32
  }
  func.func @transform_2(%arg0: i32, %arg1: i32) -> (i32, i32, i32) {
    %c0_i32 = arith.constant 0 : i32
    %c0_i32_0 = arith.constant 0 : i32
    %c0_i32_1 = arith.constant 0 : i32
    %c0_i32_2 = arith.constant 0 : i32
    return %c0_i32, %c0_i32_0, %c0_i32_1 : i32, i32, i32
  }
  func.func @transform_3(%arg0: i32, %arg1: i32) -> (i32, i32, i32) {
    %c0_i32 = arith.constant 0 : i32
    %c0_i32_0 = arith.constant 0 : i32
    %c0_i32_1 = arith.constant 0 : i32
    %c0_i32_2 = arith.constant 0 : i32
    return %c0_i32, %c0_i32_0, %c0_i32_1 : i32, i32, i32
  }
  func.func @transform_4(%arg0: i32, %arg1: i32) -> (i32, i32, i32) {
    %c0_i32 = arith.constant 0 : i32
    %c0_i32_0 = arith.constant 0 : i32
    %c0_i32_1 = arith.constant 0 : i32
    %c0_i32_2 = arith.constant 0 : i32
    return %c0_i32, %c0_i32_0, %c0_i32_1 : i32, i32, i32
  }
  func.func @transform_5(%arg0: i32, %arg1: i32) -> (i32, i32, i32) {
    %c0_i32 = arith.constant 0 : i32
    %c0_i32_0 = arith.constant 0 : i32
    return %arg0, %c0_i32, %arg1 : i32, i32, i32
  }
}

</mosaic_0001>

<llo_original>
// kernel: pos_extraction_forward.1
$region0: #{pos_extraction_forward.1}
  #allocation0 [shape = 'u32[]', space=smem, size = 0x4, offset = 0x4, fixed_abs, tag = 'smem constant byte address 0x4 - core index']
  #allocation1 [shape = 'u32[144,128]{1,0:T(1,128)}', space=vmem, size = 0x12000, scoped, tag = 'internal scratch']
  %s0 = inlined_call_operand.vmem [shape: f32[2,64,256], index: 0, kind: input, shape index: {}]
  %s1 = inlined_call_operand.hbm [shape: f32[2,64,64], index: 1, kind: input, shape index: {}]
  %s2 = inlined_call_operand.vmem [shape: f32[2,64,1], index: 2, kind: input, shape index: {}]
  %s3 = inlined_call_operand.hbm [shape: f32[2,64,64], index: 3, kind: input, shape index: {}]
  %s4 = inlined_call_operand.vmem [shape: f32[2,64,1], index: 4, kind: input, shape index: {}]
  %s5 = inlined_call_operand.hbm [shape: f32[2,64,256], index: 5, kind: output, shape index: {}]
  %s6 = sld [smem:[#allocation0]]
  $region61: #{pos_extraction_forward.1} parent=0
    _
  %s8 = ssub.s32 1, %s6
  %s9 = scalar_select 0, %s8, %s6
  $region1: #{pos_extraction_forward.1} parent=0
    #allocation2 [shape = 'u8[65536]{0}', space=vmem, size = 0x10000, scoped, tag = 'input window, operand 1, single buffered']
    #allocation3 [shape = 's32[2]{0}', space=sflag, size = 0x8, scoped, tag = 'scoped memory for pos_extraction_forward.1']
    #allocation4 [shape = 's32[2]{0}', space=sflag, size = 0x8, scoped, tag = 'scoped memory for pos_extraction_forward.1']
    #allocation5 [shape = 'u8[65536]{0}', space=vmem, size = 0x10000, scoped, tag = 'input window, operand 3, single buffered']
    #allocation6 [shape = 's32[1]{0}', space=sflag, size = 0x4, scoped, tag = 'scoped memory for pos_extraction_forward.1']
    #allocation7 [shape = 'u8[131072]{0}', space=vmem, size = 0x20000, scoped, tag = 'output window, operand 0']
    %10 = vsyncpa [#allocation3], 0
    %11 = vsyncpa [#allocation6], 0
    %12 = vsyncpa [#allocation4], 0
    %s13 = scalar_lea.sflag [#allocation4], 1
    %14 = vsyncpa %s13, 0
    loop: start=0, step=1, limit=4
    $region2: #{pos_extraction_forward.1} parent=1 // loop_pre_header
      _
    $region3: #{pos_extraction_forward.1} parent=1 // loop_header
      %s16 = sphi 0, %s20
      %p17 = scmp.ge.s32.totalorder %s16, 4
      %s23 = sphi 0, %s35
      %s24 = sphi 0, %s31
      %s25 = sphi 0, %s23
      %s26 = sphi 0, %s24
      %s27 = sphi 0, %s25
      %s28 = sphi 0, %s26
      %s40 = sphi 0, %s42
      %s43 = sphi 0, %s40
      %s44 = sphi 0, %s43
      %s60 = sphi 0, %s44
      %s64 = sphi 0, %s64
      %s66 = sphi 0, %s64
      %s67 = sphi 0, %s66
      %s81 = sphi 0, %s67
      %s85 = sphi 0, %s85
      %s87 = sphi 0, %s85
      %s88 = sphi 0, %s87
      %s102 = sphi 0, %s88
      %s106 = sphi 0, %s106
      %s108 = sphi 0, %s106
      %s109 = sphi 0, %s108
      %s123 = sphi 0, %s109
      %s127 = sphi 0, %s127
      %s129 = sphi 0, %s127
      %s130 = sphi 0, %s129
      %s144 = sphi 0, %s130
      %s152 = sphi 0, %s154
      %s155 = sphi 0, %s152
      %s156 = sphi 0, %s155
      %s172 = sphi 0, %s156
    $region4: #{pos_extraction_forward.1} parent=1 // loop_header_branch
      %19 = sbr.rel (%p17) target = $region8
    $region5: #{pos_extraction_forward.1} parent=1 // loop_body
      %s21 = ssub.s32 %s16, 1
      %s22 = ssub.s32 %s16, 2
      %s29 = sadd.s32 1, %s24
      %p30 = scmp.ge.s32.totalorder %s29, 1
      %s31 = scalar_select %p30, 0, %s29
      %s32 = sadd.s32 1, %s23
      %s33 = scalar_select %p30, %s32, %s23
      %p34 = scmp.ge.s32.totalorder %s33, 2
      %s35 = scalar_select %p34, 0, %s33
      %s36 = ssub.s32 %s23, %s35
      %s37 = ssub.s32 %s24, %s31
      %s38 = sor.u32 %s36, %s37
      %p39 = scmp.eq.s32.totalorder %s38, 0
      %s41 = sadd.s32 %s40, 1
      %s42 = scalar_select %p39, %s40, %s41
      %p45 = pneg %p39
      %p46 = scmp.eq.s32.totalorder %s16, 1
      %p47 = por %p45, %p46
      %p48 = scmp.ne.s32.totalorder %s40, %s43
      %p49 = scmp.eq.s32.totalorder %s16, 0
      %p50 = por %p48, %p49
      %p51 = scmp.ne.s32.totalorder %s40, %s43
      %p52 = scmp.eq.s32.totalorder %s21, 1
      %p53 = por %p51, %p52
      %p54 = scmp.ne.s32.totalorder %s43, %s44
      %p55 = scmp.eq.s32.totalorder %s21, 0
      %p56 = por %p54, %p55
      %p57 = scmp.ne.s32.totalorder %s43, %s44
      %p58 = scmp.eq.s32.totalorder %s22, 1
      %p59 = por %p57, %p58
      %p61 = scmp.ne.s32.totalorder %s44, %s60
      %p62 = scmp.eq.s32.totalorder %s22, 0
      %p63 = por %p61, %p62
      %s65 = sadd.s32 %s64, 1
      %p68 = scmp.eq.s32.totalorder %s16, 1
      %p69 = scmp.ne.s32.totalorder %s64, %s66
      %p70 = scmp.eq.s32.totalorder %s16, 0
      %p71 = por %p69, %p70
      %p72 = scmp.ne.s32.totalorder %s64, %s66
      %p73 = scmp.eq.s32.totalorder %s21, 1
      %p74 = por %p72, %p73
      %p75 = scmp.ne.s32.totalorder %s66, %s67
      %p76 = scmp.eq.s32.totalorder %s21, 0
      %p77 = por %p75, %p76
      %p78 = scmp.ne.s32.totalorder %s66, %s67
      %p79 = scmp.eq.s32.totalorder %s22, 1
      %p80 = por %p78, %p79
      %p82 = scmp.ne.s32.totalorder %s67, %s81
      %p83 = scmp.eq.s32.totalorder %s22, 0
      %p84 = por %p82, %p83
      %s86 = sadd.s32 %s85, 1
      %p89 = scmp.eq.s32.totalorder %s16, 1
      %p90 = scmp.ne.s32.totalorder %s85, %s87
      %p91 = scmp.eq.s32.totalorder %s16, 0
      %p92 = por %p90, %p91
      %p93 = scmp.ne.s32.totalorder %s85, %s87
      %p94 = scmp.eq.s32.totalorder %s21, 1
      %p95 = por %p93, %p94
      %p96 = scmp.ne.s32.totalorder %s87, %s88
      %p97 = scmp.eq.s32.totalorder %s21, 0
      %p98 = por %p96, %p97
      %p99 = scmp.ne.s32.totalorder %s87, %s88
      %p100 = scmp.eq.s32.totalorder %s22, 1
      %p101 = por %p99, %p100
      %p103 = scmp.ne.s32.totalorder %s88, %s102
      %p104 = scmp.eq.s32.totalorder %s22, 0
      %p105 = por %p103, %p104
      %s107 = sadd.s32 %s106, 1
      %p110 = scmp.eq.s32.totalorder %s16, 1
      %p111 = scmp.ne.s32.totalorder %s106, %s108
      %p112 = scmp.eq.s32.totalorder %s16, 0
      %p113 = por %p111, %p112
      %p114 = scmp.ne.s32.totalorder %s106, %s108
      %p115 = scmp.eq.s32.totalorder %s21, 1
      %p116 = por %p114, %p115
      %p117 = scmp.ne.s32.totalorder %s108, %s109
      %p118 = scmp.eq.s32.totalorder %s21, 0
      %p119 = por %p117, %p118
      %p120 = scmp.ne.s32.totalorder %s108, %s109
      %p121 = scmp.eq.s32.totalorder %s22, 1
      %p122 = por %p120, %p121
      %p124 = scmp.ne.s32.totalorder %s109, %s123
      %p125 = scmp.eq.s32.totalorder %s22, 0
      %p126 = por %p124, %p125
      %s128 = sadd.s32 %s127, 1
      %p131 = scmp.eq.s32.totalorder %s16, 1
      %p132 = scmp.ne.s32.totalorder %s127, %s129
      %p133 = scmp.eq.s32.totalorder %s16, 0
      %p134 = por %p132, %p133
      %p135 = scmp.ne.s32.totalorder %s127, %s129
      %p136 = scmp.eq.s32.totalorder %s21, 1
      %p137 = por %p135, %p136
      %p138 = scmp.ne.s32.totalorder %s129, %s130
      %p139 = scmp.eq.s32.totalorder %s21, 0
      %p140 = por %p138, %p139
      %p141 = scmp.ne.s32.totalorder %s129, %s130
      %p142 = scmp.eq.s32.totalorder %s22, 1
      %p143 = por %p141, %p142
      %p145 = scmp.ne.s32.totalorder %s130, %s144
      %p146 = scmp.eq.s32.totalorder %s22, 0
      %p147 = por %p145, %p146
      %s148 = ssub.s32 %s23, %s35
      %s149 = ssub.s32 %s24, %s31
      %s150 = sor.u32 %s148, %s149
      %p151 = scmp.eq.s32.totalorder %s150, 0
      %s153 = sadd.s32 %s152, 1
      %s154 = scalar_select %p151, %s152, %s153
      %p157 = pneg %p151
      %p158 = scmp.eq.s32.totalorder %s16, 1
      %p159 = por %p157, %p158
      %p160 = scmp.ne.s32.totalorder %s152, %s155
      %p161 = scmp.eq.s32.totalorder %s16, 0
      %p162 = por %p160, %p161
      %p163 = scmp.ne.s32.totalorder %s152, %s155
      %p164 = scmp.eq.s32.totalorder %s21, 1
      %p165 = por %p163, %p164
      %p166 = scmp.ne.s32.totalorder %s155, %s156
      %p167 = scmp.eq.s32.totalorder %s21, 0
      %p168 = por %p166, %p167
      %p169 = scmp.ne.s32.totalorder %s155, %s156
      %p170 = scmp.eq.s32.totalorder %s22, 1
      %p171 = por %p169, %p170
      %p173 = scmp.ne.s32.totalorder %s156, %s172
      %p174 = scmp.eq.s32.totalorder %s22, 0
      %p175 = por %p173, %p174
      %p176 = scmp.le.s32.totalorder 1, %s16
      %p177 = scmp.lt.s32.totalorder %s16, 3
      %p178 = pnand %p176, %p177
      %p179 = pneg %p178
      // Predicated region
      $region9: #{pos_extraction_forward.1} parent=5 // pred_check
        _
      $region10: #{pos_extraction_forward.1} parent=5 // pred_check_branch
        %181 = sbr.rel (%p178) target = $region12
      $region11: #{pos_extraction_forward.1} parent=5 // pred_region
        %s182 = ssub.s32 %s16, 1
        // Predicated region
        $region13: #{pos_extraction_forward.1} parent=11 // pred_check
          %p183 = pneg %p77
        $region14: #{pos_extraction_forward.1} parent=11 // pred_check_branch
          %185 = sbr.rel (%p183) target = $region16
        $region15: #{pos_extraction_forward.1} parent=11 // pred_region
          %s187 = ssub.s32 2048, 2048
          %188 = vsyncadd [#allocation3], %s187
          %s189 = sshll.u32 [#allocation2], 4
          %s190 = int_to_ptr.vmem [resolvable:$true] %s189
          %195 = dma.hbm_to_vmem [thread:$0]  %s1, 2048, %s190, [#allocation3], 128, 128, 8
        $region16: #{pos_extraction_forward.1} parent=11 // pred_fallthru
          _
        // Predicated region
        $region17: #{pos_extraction_forward.1} parent=11 // pred_check
          %p196 = pneg %p98
        $region18: #{pos_extraction_forward.1} parent=11 // pred_check_branch
          %198 = sbr.rel (%p196) target = $region20
        $region19: #{pos_extraction_forward.1} parent=11 // pred_region
          _
        $region20: #{pos_extraction_forward.1} parent=11 // pred_fallthru
          _
        // Predicated region
        $region21: #{pos_extraction_forward.1} parent=11 // pred_check
          %p199 = pneg %p119
        $region22: #{pos_extraction_forward.1} parent=11 // pred_check_branch
          %201 = sbr.rel (%p199) target = $region24
        $region23: #{pos_extraction_forward.1} parent=11 // pred_region
          %s203 = ssub.s32 2048, 2048
          %204 = vsyncadd [#allocation6], %s203
          %s205 = sshll.u32 [#allocation5], 4
          %s206 = int_to_ptr.vmem [resolvable:$true] %s205
          %211 = dma.hbm_to_vmem [thread:$0]  %s3, 2048, %s206, [#allocation6], 128, 128, 8
        $region24: #{pos_extraction_forward.1} parent=11 // pred_fallthru
          _
        // Predicated region
        $region25: #{pos_extraction_forward.1} parent=11 // pred_check
          %p212 = pneg %p140
        $region26: #{pos_extraction_forward.1} parent=11 // pred_check_branch
          %214 = sbr.rel (%p212) target = $region28
        $region27: #{pos_extraction_forward.1} parent=11 // pred_region
          _
        $region28: #{pos_extraction_forward.1} parent=11 // pred_fallthru
          _
      $region12: #{pos_extraction_forward.1} parent=5 // pred_fallthru
        _
      %p215 = scmp.lt.s32.totalorder %s16, 2
      // Predicated region
      $region29: #{pos_extraction_forward.1} parent=5 // pred_check
        %p216 = pneg %p215
      $region30: #{pos_extraction_forward.1} parent=5 // pred_check_branch
        %218 = sbr.rel (%p216) target = $region32
      $region31: #{pos_extraction_forward.1} parent=5 // pred_region
        // Predicated region
        $region33: #{pos_extraction_forward.1} parent=31 // pred_check
          %p219 = pneg %p50
        $region34: #{pos_extraction_forward.1} parent=31 // pred_check_branch
          %221 = sbr.rel (%p219) target = $region36
        $region35: #{pos_extraction_forward.1} parent=31 // pred_region
          %s222 = smul.u32 2, %s24
          %p223 = scmp.lt.s32.totalorder %s23, 1
          %s224 = scalar_select %p223, %s23, 1
          %p225 = scmp.lt.s32.totalorder %s222, 1
          %s226 = scalar_select %p225, %s222, 1
          %s227 = smul.addr %s224, 16
          %s228 = sadd.s32 %s226, %s227
          %s229 = smul.addr %s228, 8
          %s230 = scalar_lea.vmem %s0, %s229
          %s231 = smul.u32 2, %s24
        $region36: #{pos_extraction_forward.1} parent=31 // pred_fallthru
          _
      $region32: #{pos_extraction_forward.1} parent=5 // pred_fallthru
        _
      %p232 = scmp.le.s32.totalorder 1, %s16
      %p233 = scmp.lt.s32.totalorder %s16, 3
      %p234 = pnand %p232, %p233
      %p235 = pneg %p234
      // Predicated region
      $region37: #{pos_extraction_forward.1} parent=5 // pred_check
        _
      $region38: #{pos_extraction_forward.1} parent=5 // pred_check_branch
        %237 = sbr.rel (%p234) target = $region40
      $region39: #{pos_extraction_forward.1} parent=5 // pred_region
        %s238 = ssub.s32 %s16, 1
        // Predicated region
        $region41: #{pos_extraction_forward.1} parent=39 // pred_check
          %p239 = pneg %p77
        $region42: #{pos_extraction_forward.1} parent=39 // pred_check_branch
          %241 = sbr.rel (%p239) target = $region44
        $region43: #{pos_extraction_forward.1} parent=39 // pred_region
          %242 = dma.done [#allocation3], 2048
        $region44: #{pos_extraction_forward.1} parent=39 // pred_fallthru
          _
        // Predicated region
        $region45: #{pos_extraction_forward.1} parent=39 // pred_check
          %p243 = pneg %p119
        $region46: #{pos_extraction_forward.1} parent=39 // pred_check_branch
          %245 = sbr.rel (%p243) target = $region48
        $region47: #{pos_extraction_forward.1} parent=39 // pred_region
          %246 = dma.done [#allocation6], 2048
        $region48: #{pos_extraction_forward.1} parent=39 // pred_fallthru
          _
        %s247 = smul.u32 2, %s26
        %p248 = scmp.lt.s32.totalorder %s25, 1
        %s249 = scalar_select %p248, %s25, 1
        %p250 = scmp.lt.s32.totalorder %s247, 1
        %s251 = scalar_select %p250, %s247, 1
        %s252 = smul.addr %s249, 16
        %s253 = sadd.s32 %s251, %s252
        %s254 = smul.addr %s253, 8
        %s255 = scalar_lea.vmem %s0, %s254
        %p256 = pneg %p56
        %p257 = pneg %p53
        %p258 = pneg %p77
        %p259 = pneg %p74
        %p260 = pneg %p98
        %p261 = pneg %p95
        %p262 = pneg %p119
        %p263 = pneg %p116
        %p264 = pneg %p140
        %p265 = pneg %p137
        %p266 = pneg %p168
        %p267 = pneg %p165
        %s268 = sand.u32 %s155, 1
        %s269 = scalar_lea.sflag [#allocation4], %s268
        %s270 = sand.u32 %s155, 1
        %s271 = smul.addr %s270, 128
        %s272 = scalar_lea.vmem [#allocation7], %s271
        %s273 = smul.u32 2, %s26
        %p274 = scmp.lt.s32.totalorder %s25, 1
        %s275 = scalar_select %p274, %s25, 1
        %p276 = scmp.lt.s32.totalorder %s273, 1
        %s277 = scalar_select %p276, %s273, 1
        %s278 = smul.addr %s275, 16
        %s279 = sadd.s32 %s277, %s278
        %s280 = smul.addr %s279, 8
        %s281 = scalar_lea.vmem %s0, %s280
        %s282 = smul.u32 2, %s26
        %s283 = smul.u32 2, %s26
        %v284 = vld [vmem:[%s281] sm:$0xff]
        %v285 = vld [vmem:[%s281 + $0x8] sm:$0xff]
        %v286 = vld [vmem:[%s281 + $0x10] sm:$0xff]
        %v287 = vld [vmem:[%s281 + $0x18] sm:$0xff]
        %v288 = vld [vmem:[%s281 + $0x20] sm:$0xff]
        %v289 = vld [vmem:[%s281 + $0x28] sm:$0xff]
        %v290 = vld [vmem:[%s281 + $0x30] sm:$0xff]
        %v291 = vld [vmem:[%s281 + $0x38] sm:$0xff]
        %v292 = vld [vmem:[%s281 + $0x40] sm:$0xff]
        %v293 = vld [vmem:[%s281 + $0x48] sm:$0xff]
        %v294 = vld [vmem:[%s281 + $0x50] sm:$0xff]
        %v295 = vld [vmem:[%s281 + $0x58] sm:$0xff]
        %v296 = vld [vmem:[%s281 + $0x60] sm:$0xff]
        %v297 = vld [vmem:[%s281 + $0x68] sm:$0xff]
        %v298 = vld [vmem:[%s281 + $0x70] sm:$0xff]
        %v299 = vld [vmem:[%s281 + $0x78] sm:$0xff]
        %v300 = vld [vmem:[#allocation2] sm:$0xff]
        %v301 = vld [vmem:[#allocation2 + $0x8] sm:$0xff]
        %v302 = vld [vmem:[#allocation2 + $0x10] sm:$0xff]
        %v303 = vld [vmem:[#allocation2 + $0x18] sm:$0xff]
        %v304 = vld [vmem:[#allocation2 + $0x20] sm:$0xff]
        %v305 = vld [vmem:[#allocation2 + $0x28] sm:$0xff]
        %v306 = vld [vmem:[#allocation2 + $0x30] sm:$0xff]
        %v307 = vld [vmem:[#allocation2 + $0x38] sm:$0xff]
        %v308 = vld [vmem:[%s2] sm:$0xff]
        %v309 = vld [vmem:[%s2 + $0x8] sm:$0xff]
        %v310 = vld [vmem:[%s2 + $0x10] sm:$0xff]
        %v311 = vld [vmem:[%s2 + $0x18] sm:$0xff]
        %v312 = vld [vmem:[%s2 + $0x20] sm:$0xff]
        %v313 = vld [vmem:[%s2 + $0x28] sm:$0xff]
        %v314 = vld [vmem:[%s2 + $0x30] sm:$0xff]
        %v315 = vld [vmem:[%s2 + $0x38] sm:$0xff]
        %v316 = vld [vmem:[#allocation5] sm:$0xff]
        %v317 = vld [vmem:[#allocation5 + $0x8] sm:$0xff]
        %v318 = vld [vmem:[#allocation5 + $0x10] sm:$0xff]
        %v319 = vld [vmem:[#allocation5 + $0x18] sm:$0xff]
        %v320 = vld [vmem:[#allocation5 + $0x20] sm:$0xff]
        %v321 = vld [vmem:[#allocation5 + $0x28] sm:$0xff]
        %v322 = vld [vmem:[#allocation5 + $0x30] sm:$0xff]
        %v323 = vld [vmem:[#allocation5 + $0x38] sm:$0xff]
        %v324 = vld [vmem:[%s4] sm:$0xff]
        %v325 = vld [vmem:[%s4 + $0x8] sm:$0xff]
        %v326 = vld [vmem:[%s4 + $0x10] sm:$0xff]
        %v327 = vld [vmem:[%s4 + $0x18] sm:$0xff]
        %v328 = vld [vmem:[%s4 + $0x20] sm:$0xff]
        %v329 = vld [vmem:[%s4 + $0x28] sm:$0xff]
        %v330 = vld [vmem:[%s4 + $0x30] sm:$0xff]
        %v331 = vld [vmem:[%s4 + $0x38] sm:$0xff]
        %333 = vset.pattern.permute.xlu0 0
        %334 = vperm.xlu0 %333, %v308
        %v335 = vpop.permute.xlu0 %334
        %338 = vset.pattern.permute.xlu0 0
        %339 = vperm.xlu0 %338, %v309
        %v340 = vpop.permute.xlu0 %339
        %343 = vset.pattern.permute.xlu0 0
        %344 = vperm.xlu0 %343, %v310
        %v345 = vpop.permute.xlu0 %344
        %348 = vset.pattern.permute.xlu0 0
        %349 = vperm.xlu0 %348, %v311
        %v350 = vpop.permute.xlu0 %349
        %353 = vset.pattern.permute.xlu0 0
        %354 = vperm.xlu0 %353, %v312
        %v355 = vpop.permute.xlu0 %354
        %358 = vset.pattern.permute.xlu0 0
        %359 = vperm.xlu0 %358, %v313
        %v360 = vpop.permute.xlu0 %359
        %363 = vset.pattern.permute.xlu0 0
        %364 = vperm.xlu0 %363, %v314
        %v365 = vpop.permute.xlu0 %364
        %368 = vset.pattern.permute.xlu0 0
        %369 = vperm.xlu0 %368, %v315
        %v370 = vpop.permute.xlu0 %369
        %vm372 = vcmask 523264
        %v374 = vsel %vm372, %v300, 0
        %v377 = vsel %vm372, %v301, 0
        %v380 = vsel %vm372, %v302, 0
        %v383 = vsel %vm372, %v303, 0
        %v386 = vsel %vm372, %v304, 0
        %v389 = vsel %vm372, %v305, 0
        %v392 = vsel %vm372, %v306, 0
        %v395 = vsel %vm372, %v307, 0
        %397 = vmatprep.subr.mxu0 %v285
        %398 = vmatpush1.msra.mxu0 %v284
        %399 = vmatprep.subr.mxu0 %v287
        %400 = vmatpush1.msra.mxu0 %v286
        %401 = vmatprep.subr.mxu0 %v289
        %402 = vmatpush1.msra.mxu0 %v288
        %403 = vmatprep.subr.mxu0 %v291
        %404 = vmatpush1.msra.mxu0 %v290
        %405 = vmatprep.subr.mxu0 %v293
        %406 = vmatpush1.msra.mxu0 %v292
        %407 = vmatprep.subr.mxu0 %v295
        %408 = vmatpush1.msra.mxu0 %v294
        %409 = vmatprep.subr.mxu0 %v297
        %410 = vmatpush1.msra.mxu0 %v296
        %411 = vmatprep.subr.mxu0 %v299
        %412 = vmatpush1.msra.mxu0 %v298
        %413 = vmatprep.subr.mxu0 0.0
        %414 = vmatpush1.msra.mxu0 0.0
        %415 = vmatprep.subr.mxu0 0.0
        %416 = vmatpush1.msra.mxu0 0.0
        %417 = vmatprep.subr.mxu0 0.0
        %418 = vmatpush1.msra.mxu0 0.0
        %419 = vmatprep.subr.mxu0 0.0
        %420 = vmatpush1.msra.mxu0 0.0
        %421 = vmatprep.subr.mxu0 0.0
        %422 = vmatpush1.msra.mxu0 0.0
        %423 = vmatprep.subr.mxu0 0.0
        %424 = vmatpush1.msra.mxu0 0.0
        %425 = vmatprep.subr.mxu0 0.0
        %426 = vmatpush1.msra.mxu0 0.0
        %427 = vmatprep.subr.mxu0 0.0
        %428 = vmatpush1.msra.mxu0 0.0
        %429 = vmatprep.subr.mxu0 0.0
        %430 = vmatpush1.msra.mxu0 0.0
        %431 = vmatprep.subr.mxu0 0.0
        %432 = vmatpush1.msra.mxu0 0.0
        %433 = vmatprep.subr.mxu0 0.0
        %434 = vmatpush1.msra.mxu0 0.0
        %435 = vmatprep.subr.mxu0 0.0
        %436 = vmatpush1.msra.mxu0 0.0
        %437 = vmatprep.subr.mxu0 0.0
        %438 = vmatpush1.msra.mxu0 0.0
        %439 = vmatprep.subr.mxu0 0.0
        %440 = vmatpush1.msra.mxu0 0.0
        %441 = vmatprep.subr.mxu0 0.0
        %442 = vmatpush1.msra.mxu0 0.0
        %443 = vmatprep.subr.mxu0 0.0
        %444 = vmatpush1.msra.mxu0 0.0
        %445 = vmatprep.subr.mxu0 0.0
        %446 = vmatpush1.msra.mxu0 0.0
        %447 = vmatprep.subr.mxu0 0.0
        %448 = vmatpush1.msra.mxu0 0.0
        %449 = vmatprep.subr.mxu0 0.0
        %450 = vmatpush1.msra.mxu0 0.0
        %451 = vmatprep.subr.mxu0 0.0
        %452 = vmatpush1.msra.mxu0 0.0
        %453 = vmatprep.subr.mxu0 0.0
        %454 = vmatpush1.msra.mxu0 0.0
        %455 = vmatprep.subr.mxu0 0.0
        %456 = vmatpush1.msra.mxu0 0.0
        %457 = vmatprep.subr.mxu0 0.0
        %458 = vmatpush1.msra.mxu0 0.0
        %459 = vmatprep.subr.mxu0 0.0
        %460 = vmatpush1.msra.mxu0 0.0
        %461 = vmatprep.mubr.f32.mxu0 0.0
        %462 = vmatmul.mubr.f32.gmra.mrb[0].mxu0 %v374
        %v463 = vpop.f32.mrb[0].mxu0
        %v464 = vadd.f32 %v335, %v463
        %v465 = vpop.f32.mrb[0].mxu0
        %v466 = vadd.f32 %v335, %v465
        %467 = vmatprep.mubr.f32.mxu0 0.0
        %468 = vmatmul.mubr.f32.gmra.mrb[0].mxu0 %v377
        %v469 = vpop.f32.mrb[0].mxu0
        %v470 = vadd.f32 %v340, %v469
        %v471 = vpop.f32.mrb[0].mxu0
        %v472 = vadd.f32 %v340, %v471
        %473 = vmatprep.mubr.f32.mxu0 0.0
        %474 = vmatmul.mubr.f32.gmra.mrb[0].mxu0 %v380
        %v475 = vpop.f32.mrb[0].mxu0
        %v476 = vadd.f32 %v345, %v475
        %v477 = vpop.f32.mrb[0].mxu0
        %v478 = vadd.f32 %v345, %v477
        %479 = vmatprep.mubr.f32.mxu0 0.0
        %480 = vmatmul.mubr.f32.gmra.mrb[0].mxu0 %v383
        %v481 = vpop.f32.mrb[0].mxu0
        %v482 = vadd.f32 %v350, %v481
        %v483 = vpop.f32.mrb[0].mxu0
        %v484 = vadd.f32 %v350, %v483
        %485 = vmatprep.mubr.f32.mxu0 0.0
        %486 = vmatmul.mubr.f32.gmra.mrb[0].mxu0 %v386
        %v487 = vpop.f32.mrb[0].mxu0
        %v488 = vadd.f32 %v355, %v487
        %v489 = vpop.f32.mrb[0].mxu0
        %v490 = vadd.f32 %v355, %v489
        %491 = vmatprep.mubr.f32.mxu0 0.0
        %492 = vmatmul.mubr.f32.gmra.mrb[0].mxu0 %v389
        %v493 = vpop.f32.mrb[0].mxu0
        %v494 = vadd.f32 %v360, %v493
        %v495 = vpop.f32.mrb[0].mxu0
        %v496 = vadd.f32 %v360, %v495
        %497 = vmatprep.mubr.f32.mxu0 0.0
        %498 = vmatmul.mubr.f32.gmra.mrb[0].mxu0 %v392
        %v499 = vpop.f32.mrb[0].mxu0
        %v500 = vadd.f32 %v365, %v499
        %v501 = vpop.f32.mrb[0].mxu0
        %v502 = vadd.f32 %v365, %v501
        %503 = vmatprep.mubr.f32.mxu0 0.0
        %504 = vmatmul.mubr.f32.gmra.mrb[0].mxu0 %v395
        %v505 = vpop.f32.mrb[0].mxu0
        %v506 = vadd.f32 %v370, %v505
        %v507 = vpop.f32.mrb[0].mxu0
        %v508 = vadd.f32 %v370, %v507
        %509 = vdwg.mxu0
        %v510 = vmax.f32 %v464, 0.0
        %v511 = vmax.f32 %v466, 0.0
        %v512 = vmax.f32 %v470, 0.0
        %v513 = vmax.f32 %v472, 0.0
        %v514 = vmax.f32 %v476, 0.0
        %v515 = vmax.f32 %v478, 0.0
        %v516 = vmax.f32 %v482, 0.0
        %v517 = vmax.f32 %v484, 0.0
        %v518 = vmax.f32 %v488, 0.0
        %v519 = vmax.f32 %v490, 0.0
        %v520 = vmax.f32 %v494, 0.0
        %v521 = vmax.f32 %v496, 0.0
        %v522 = vmax.f32 %v500, 0.0
        %v523 = vmax.f32 %v502, 0.0
        %v524 = vmax.f32 %v506, 0.0
        %v525 = vmax.f32 %v508, 0.0
        %527 = vset.pattern.permute.xlu0 0
        %528 = vperm.xlu0 %527, %v324
        %v529 = vpop.permute.xlu0 %528
        %532 = vset.pattern.permute.xlu0 0
        %533 = vperm.xlu0 %532, %v325
        %v534 = vpop.permute.xlu0 %533
        %537 = vset.pattern.permute.xlu0 0
        %538 = vperm.xlu0 %537, %v326
        %v539 = vpop.permute.xlu0 %538
        %542 = vset.pattern.permute.xlu0 0
        %543 = vperm.xlu0 %542, %v327
        %v544 = vpop.permute.xlu0 %543
        %547 = vset.pattern.permute.xlu0 0
        %548 = vperm.xlu0 %547, %v328
        %v549 = vpop.permute.xlu0 %548
        %552 = vset.pattern.permute.xlu0 0
        %553 = vperm.xlu0 %552, %v329
        %v554 = vpop.permute.xlu0 %553
        %557 = vset.pattern.permute.xlu0 0
        %558 = vperm.xlu0 %557, %v330
        %v559 = vpop.permute.xlu0 %558
        %562 = vset.pattern.permute.xlu0 0
        %563 = vperm.xlu0 %562, %v331
        %v564 = vpop.permute.xlu0 %563
        %v567 = vsel %vm372, %v316, 0
        %v570 = vsel %vm372, %v317, 0
        %v573 = vsel %vm372, %v318, 0
        %v576 = vsel %vm372, %v319, 0
        %v579 = vsel %vm372, %v320, 0
        %v582 = vsel %vm372, %v321, 0
        %v585 = vsel %vm372, %v322, 0
        %v588 = vsel %vm372, %v323, 0
        %590 = vmatprep.subr.mxu0 %v511
        %591 = vmatpush1.msra.mxu0 %v510
        %592 = vmatprep.subr.mxu0 %v513
        %593 = vmatpush1.msra.mxu0 %v512
        %594 = vmatprep.subr.mxu0 %v515
        %595 = vmatpush1.msra.mxu0 %v514
        %596 = vmatprep.subr.mxu0 %v517
        %597 = vmatpush1.msra.mxu0 %v516
        %598 = vmatprep.subr.mxu0 %v519
        %599 = vmatpush1.msra.mxu0 %v518
        %600 = vmatprep.subr.mxu0 %v521
        %601 = vmatpush1.msra.mxu0 %v520
        %602 = vmatprep.subr.mxu0 %v523
        %603 = vmatpush1.msra.mxu0 %v522
        %604 = vmatprep.subr.mxu0 %v525
        %605 = vmatpush1.msra.mxu0 %v524
        %606 = vmatprep.subr.mxu0 0.0
        %607 = vmatpush1.msra.mxu0 0.0
        %608 = vmatprep.subr.mxu0 0.0
        %609 = vmatpush1.msra.mxu0 0.0
        %610 = vmatprep.subr.mxu0 0.0
        %611 = vmatpush1.msra.mxu0 0.0
        %612 = vmatprep.subr.mxu0 0.0
        %613 = vmatpush1.msra.mxu0 0.0
        %614 = vmatprep.subr.mxu0 0.0
        %615 = vmatpush1.msra.mxu0 0.0
        %616 = vmatprep.subr.mxu0 0.0
        %617 = vmatpush1.msra.mxu0 0.0
        %618 = vmatprep.subr.mxu0 0.0
        %619 = vmatpush1.msra.mxu0 0.0
        %620 = vmatprep.subr.mxu0 0.0
        %621 = vmatpush1.msra.mxu0 0.0
        %622 = vmatprep.subr.mxu0 0.0
        %623 = vmatpush1.msra.mxu0 0.0
        %624 = vmatprep.subr.mxu0 0.0
        %625 = vmatpush1.msra.mxu0 0.0
        %626 = vmatprep.subr.mxu0 0.0
        %627 = vmatpush1.msra.mxu0 0.0
        %628 = vmatprep.subr.mxu0 0.0
        %629 = vmatpush1.msra.mxu0 0.0
        %630 = vmatprep.subr.mxu0 0.0
        %631 = vmatpush1.msra.mxu0 0.0
        %632 = vmatprep.subr.mxu0 0.0
        %633 = vmatpush1.msra.mxu0 0.0
        %634 = vmatprep.subr.mxu0 0.0
        %635 = vmatpush1.msra.mxu0 0.0
        %636 = vmatprep.subr.mxu0 0.0
        %637 = vmatpush1.msra.mxu0 0.0
        %638 = vmatprep.subr.mxu0 0.0
        %639 = vmatpush1.msra.mxu0 0.0
        %640 = vmatprep.subr.mxu0 0.0
        %641 = vmatpush1.msra.mxu0 0.0
        %642 = vmatprep.subr.mxu0 0.0
        %643 = vmatpush1.msra.mxu0 0.0
        %644 = vmatprep.subr.mxu0 0.0
        %645 = vmatpush1.msra.mxu0 0.0
        %646 = vmatprep.subr.mxu0 0.0
        %647 = vmatpush1.msra.mxu0 0.0
        %648 = vmatprep.subr.mxu0 0.0
        %649 = vmatpush1.msra.mxu0 0.0
        %650 = vmatprep.subr.mxu0 0.0
        %651 = vmatpush1.msra.mxu0 0.0
        %652 = vmatprep.subr.mxu0 0.0
        %653 = vmatpush1.msra.mxu0 0.0
        %654 = vmatprep.mubr.f32.mxu0 0.0
        %655 = vmatmul.mubr.f32.gmra.mrb[0].mxu0 %v567
        %v656 = vpop.f32.mrb[0].mxu0
        %v657 = vadd.f32 %v529, %v656
        %v658 = vpop.f32.mrb[0].mxu0
        %v659 = vadd.f32 %v529, %v658
        %660 = vmatprep.mubr.f32.mxu0 0.0
        %661 = vmatmul.mubr.f32.gmra.mrb[0].mxu0 %v570
        %v662 = vpop.f32.mrb[0].mxu0
        %v663 = vadd.f32 %v534, %v662
        %v664 = vpop.f32.mrb[0].mxu0
        %v665 = vadd.f32 %v534, %v664
        %666 = vmatprep.mubr.f32.mxu0 0.0
        %667 = vmatmul.mubr.f32.gmra.mrb[0].mxu0 %v573
        %v668 = vpop.f32.mrb[0].mxu0
        %v669 = vadd.f32 %v539, %v668
        %v670 = vpop.f32.mrb[0].mxu0
        %v671 = vadd.f32 %v539, %v670
        %672 = vmatprep.mubr.f32.mxu0 0.0
        %673 = vmatmul.mubr.f32.gmra.mrb[0].mxu0 %v576
        %v674 = vpop.f32.mrb[0].mxu0
        %v675 = vadd.f32 %v544, %v674
        %v676 = vpop.f32.mrb[0].mxu0
        %v677 = vadd.f32 %v544, %v676
        %678 = vmatprep.mubr.f32.mxu0 0.0
        %679 = vmatmul.mubr.f32.gmra.mrb[0].mxu0 %v579
        %v680 = vpop.f32.mrb[0].mxu0
        %v681 = vadd.f32 %v549, %v680
        %v682 = vpop.f32.mrb[0].mxu0
        %v683 = vadd.f32 %v549, %v682
        %684 = vmatprep.mubr.f32.mxu0 0.0
        %685 = vmatmul.mubr.f32.gmra.mrb[0].mxu0 %v582
        %v686 = vpop.f32.mrb[0].mxu0
        %v687 = vadd.f32 %v554, %v686
        %v688 = vpop.f32.mrb[0].mxu0
        %v689 = vadd.f32 %v554, %v688
        %690 = vmatprep.mubr.f32.mxu0 0.0
        %691 = vmatmul.mubr.f32.gmra.mrb[0].mxu0 %v585
        %v692 = vpop.f32.mrb[0].mxu0
        %v693 = vadd.f32 %v559, %v692
        %v694 = vpop.f32.mrb[0].mxu0
        %v695 = vadd.f32 %v559, %v694
        %696 = vmatprep.mubr.f32.mxu0 0.0
        %697 = vmatmul.mubr.f32.gmra.mrb[0].mxu0 %v588
        %v698 = vpop.f32.mrb[0].mxu0
        %v699 = vadd.f32 %v564, %v698
        %v700 = vpop.f32.mrb[0].mxu0
        %v701 = vadd.f32 %v564, %v700
        %702 = vdwg.mxu0
        %v703 = vadd.f32 %v657, %v284
        %v704 = vadd.f32 %v659, %v285
        %v705 = vadd.f32 %v663, %v286
        %v706 = vadd.f32 %v665, %v287
        %v707 = vadd.f32 %v669, %v288
        %v708 = vadd.f32 %v671, %v289
        %v709 = vadd.f32 %v675, %v290
        %v710 = vadd.f32 %v677, %v291
        %v711 = vadd.f32 %v681, %v292
        %v712 = vadd.f32 %v683, %v293
        %v713 = vadd.f32 %v687, %v294
        %v714 = vadd.f32 %v689, %v295
        %v715 = vadd.f32 %v693, %v296
        %v716 = vadd.f32 %v695, %v297
        %v717 = vadd.f32 %v699, %v298
        %v718 = vadd.f32 %v701, %v299
        %v719 = vmax.f32 %v703, 0.0
        %v720 = vmax.f32 %v704, 0.0
        %v721 = vmax.f32 %v705, 0.0
        %v722 = vmax.f32 %v706, 0.0
        %v723 = vmax.f32 %v707, 0.0
        %v724 = vmax.f32 %v708, 0.0
        %v725 = vmax.f32 %v709, 0.0
        %v726 = vmax.f32 %v710, 0.0
        %v727 = vmax.f32 %v711, 0.0
        %v728 = vmax.f32 %v712, 0.0
        %v729 = vmax.f32 %v713, 0.0
        %v730 = vmax.f32 %v714, 0.0
        %v731 = vmax.f32 %v715, 0.0
        %v732 = vmax.f32 %v716, 0.0
        %v733 = vmax.f32 %v717, 0.0
        %v734 = vmax.f32 %v718, 0.0
        %s735 = scalar_lea.vmem [#allocation2], 64
        %v736 = vld [vmem:[%s735] sm:$0xff]
        %v737 = vld [vmem:[%s735 + $0x8] sm:$0xff]
        %v738 = vld [vmem:[%s735 + $0x10] sm:$0xff]
        %v739 = vld [vmem:[%s735 + $0x18] sm:$0xff]
        %v740 = vld [vmem:[%s735 + $0x20] sm:$0xff]
        %v741 = vld [vmem:[%s735 + $0x28] sm:$0xff]
        %v742 = vld [vmem:[%s735 + $0x30] sm:$0xff]
        %v743 = vld [vmem:[%s735 + $0x38] sm:$0xff]
        %s744 = scalar_lea.vmem %s2, 64
        %v745 = vld [vmem:[%s744] sm:$0xff]
        %v746 = vld [vmem:[%s744 + $0x8] sm:$0xff]
        %v747 = vld [vmem:[%s744 + $0x10] sm:$0xff]
        %v748 = vld [vmem:[%s744 + $0x18] sm:$0xff]
        %v749 = vld [vmem:[%s744 + $0x20] sm:$0xff]
        %v750 = vld [vmem:[%s744 + $0x28] sm:$0xff]
        %v751 = vld [vmem:[%s744 + $0x30] sm:$0xff]
        %v752 = vld [vmem:[%s744 + $0x38] sm:$0xff]
        %s753 = scalar_lea.vmem [#allocation5], 64
        %v754 = vld [vmem:[%s753] sm:$0xff]
        %v755 = vld [vmem:[%s753 + $0x8] sm:$0xff]
        %v756 = vld [vmem:[%s753 + $0x10] sm:$0xff]
        %v757 = vld [vmem:[%s753 + $0x18] sm:$0xff]
        %v758 = vld [vmem:[%s753 + $0x20] sm:$0xff]
        %v759 = vld [vmem:[%s753 + $0x28] sm:$0xff]
        %v760 = vld [vmem:[%s753 + $0x30] sm:$0xff]
        %v761 = vld [vmem:[%s753 + $0x38] sm:$0xff]
        %s762 = scalar_lea.vmem %s4, 64
        %v763 = vld [vmem:[%s762] sm:$0xff]
        %v764 = vld [vmem:[%s762 + $0x8] sm:$0xff]
        %v765 = vld [vmem:[%s762 + $0x10] sm:$0xff]
        %v766 = vld [vmem:[%s762 + $0x18] sm:$0xff]
        %v767 = vld [vmem:[%s762 + $0x20] sm:$0xff]
        %v768 = vld [vmem:[%s762 + $0x28] sm:$0xff]
        %v769 = vld [vmem:[%s762 + $0x30] sm:$0xff]
        %v770 = vld [vmem:[%s762 + $0x38] sm:$0xff]
        %772 = vset.pattern.permute.xlu0 0
        %773 = vperm.xlu0 %772, %v745
        %v774 = vpop.permute.xlu0 %773
        %777 = vset.pattern.permute.xlu0 0
        %778 = vperm.xlu0 %777, %v746
        %v779 = vpop.permute.xlu0 %778
        %782 = vset.pattern.permute.xlu0 0
        %783 = vperm.xlu0 %782, %v747
        %v784 = vpop.permute.xlu0 %783
        %787 = vset.pattern.permute.xlu0 0
        %788 = vperm.xlu0 %787, %v748
        %v789 = vpop.permute.xlu0 %788
        %792 = vset.pattern.permute.xlu0 0
        %793 = vperm.xlu0 %792, %v749
        %v794 = vpop.permute.xlu0 %793
        %797 = vset.pattern.permute.xlu0 0
        %798 = vperm.xlu0 %797, %v750
        %v799 = vpop.permute.xlu0 %798
        %802 = vset.pattern.permute.xlu0 0
        %803 = vperm.xlu0 %802, %v751
        %v804 = vpop.permute.xlu0 %803
        %807 = vset.pattern.permute.xlu0 0
        %808 = vperm.xlu0 %807, %v752
        %v809 = vpop.permute.xlu0 %808
        %v812 = vsel %vm372, %v736, 0
        %v815 = vsel %vm372, %v737, 0
        %v818 = vsel %vm372, %v738, 0
        %v821 = vsel %vm372, %v739, 0
        %v824 = vsel %vm372, %v740, 0
        %v827 = vsel %vm372, %v741, 0
        %v830 = vsel %vm372, %v742, 0
        %v833 = vsel %vm372, %v743, 0
        %835 = vmatprep.subr.mxu0 %v720
        %836 = vmatpush1.msra.mxu0 %v719
        %837 = vmatprep.subr.mxu0 %v722
        %838 = vmatpush1.msra.mxu0 %v721
        %839 = vmatprep.subr.mxu0 %v724
        %840 = vmatpush1.msra.mxu0 %v723
        %841 = vmatprep.subr.mxu0 %v726
        %842 = vmatpush1.msra.mxu0 %v725
        %843 = vmatprep.subr.mxu0 %v728
        %844 = vmatpush1.msra.mxu0 %v727
        %845 = vmatprep.subr.mxu0 %v730
        %846 = vmatpush1.msra.mxu0 %v729
        %847 = vmatprep.subr.mxu0 %v732
        %848 = vmatpush1.msra.mxu0 %v731
        %849 = vmatprep.subr.mxu0 %v734
        %850 = vmatpush1.msra.mxu0 %v733
        %851 = vmatprep.subr.mxu0 0.0
        %852 = vmatpush1.msra.mxu0 0.0
        %853 = vmatprep.subr.mxu0 0.0
        %854 = vmatpush1.msra.mxu0 0.0
        %855 = vmatprep.subr.mxu0 0.0
        %856 = vmatpush1.msra.mxu0 0.0
        %857 = vmatprep.subr.mxu0 0.0
        %858 = vmatpush1.msra.mxu0 0.0
        %859 = vmatprep.subr.mxu0 0.0
        %860 = vmatpush1.msra.mxu0 0.0
        %861 = vmatprep.subr.mxu0 0.0
        %862 = vmatpush1.msra.mxu0 0.0
        %863 = vmatprep.subr.mxu0 0.0
        %864 = vmatpush1.msra.mxu0 0.0
        %865 = vmatprep.subr.mxu0 0.0
        %866 = vmatpush1.msra.mxu0 0.0
        %867 = vmatprep.subr.mxu0 0.0
        %868 = vmatpush1.msra.mxu0 0.0
        %869 = vmatprep.subr.mxu0 0.0
        %870 = vmatpush1.msra.mxu0 0.0
        %871 = vmatprep.subr.mxu0 0.0
        %872 = vmatpush1.msra.mxu0 0.0
        %873 = vmatprep.subr.mxu0 0.0
        %874 = vmatpush1.msra.mxu0 0.0
        %875 = vmatprep.subr.mxu0 0.0
        %876 = vmatpush1.msra.mxu0 0.0
        %877 = vmatprep.subr.mxu0 0.0
        %878 = vmatpush1.msra.mxu0 0.0
        %879 = vmatprep.subr.mxu0 0.0
        %880 = vmatpush1.msra.mxu0 0.0
        %881 = vmatprep.subr.mxu0 0.0
        %882 = vmatpush1.msra.mxu0 0.0
        %883 = vmatprep.subr.mxu0 0.0
        %884 = vmatpush1.msra.mxu0 0.0
        %885 = vmatprep.subr.mxu0 0.0
        %886 = vmatpush1.msra.mxu0 0.0
        %887 = vmatprep.subr.mxu0 0.0
        %888 = vmatpush1.msra.mxu0 0.0
        %889 = vmatprep.subr.mxu0 0.0
        %890 = vmatpush1.msra.mxu0 0.0
        %891 = vmatprep.subr.mxu0 0.0
        %892 = vmatpush1.msra.mxu0 0.0
        %893 = vmatprep.subr.mxu0 0.0
        %894 = vmatpush1.msra.mxu0 0.0
        %895 = vmatprep.subr.mxu0 0.0
        %896 = vmatpush1.msra.mxu0 0.0
        %897 = vmatprep.subr.mxu0 0.0
        %898 = vmatpush1.msra.mxu0 0.0
        %899 = vmatprep.mubr.f32.mxu0 0.0
        %900 = vmatmul.mubr.f32.gmra.mrb[0].mxu0 %v812
        %v901 = vpop.f32.mrb[0].mxu0
        %v902 = vadd.f32 %v774, %v901
        %v903 = vpop.f32.mrb[0].mxu0
        %v904 = vadd.f32 %v774, %v903
        %905 = vmatprep.mubr.f32.mxu0 0.0
        %906 = vmatmul.mubr.f32.gmra.mrb[0].mxu0 %v815
        %v907 = vpop.f32.mrb[0].mxu0
        %v908 = vadd.f32 %v779, %v907
        %v909 = vpop.f32.mrb[0].mxu0
        %v910 = vadd.f32 %v779, %v909
        %911 = vmatprep.mubr.f32.mxu0 0.0
        %912 = vmatmul.mubr.f32.gmra.mrb[0].mxu0 %v818
        %v913 = vpop.f32.mrb[0].mxu0
        %v914 = vadd.f32 %v784, %v913
        %v915 = vpop.f32.mrb[0].mxu0
        %v916 = vadd.f32 %v784, %v915
        %917 = vmatprep.mubr.f32.mxu0 0.0
        %918 = vmatmul.mubr.f32.gmra.mrb[0].mxu0 %v821
        %v919 = vpop.f32.mrb[0].mxu0
        %v920 = vadd.f32 %v789, %v919
        %v921 = vpop.f32.mrb[0].mxu0
        %v922 = vadd.f32 %v789, %v921
        %923 = vmatprep.mubr.f32.mxu0 0.0
        %924 = vmatmul.mubr.f32.gmra.mrb[0].mxu0 %v824
        %v925 = vpop.f32.mrb[0].mxu0
        %v926 = vadd.f32 %v794, %v925
        %v927 = vpop.f32.mrb[0].mxu0
        %v928 = vadd.f32 %v794, %v927
        %929 = vmatprep.mubr.f32.mxu0 0.0
        %930 = vmatmul.mubr.f32.gmra.mrb[0].mxu0 %v827
        %v931 = vpop.f32.mrb[0].mxu0
        %v932 = vadd.f32 %v799, %v931
        %v933 = vpop.f32.mrb[0].mxu0
        %v934 = vadd.f32 %v799, %v933
        %935 = vmatprep.mubr.f32.mxu0 0.0
        %936 = vmatmul.mubr.f32.gmra.mrb[0].mxu0 %v830
        %v937 = vpop.f32.mrb[0].mxu0
        %v938 = vadd.f32 %v804, %v937
        %v939 = vpop.f32.mrb[0].mxu0
        %v940 = vadd.f32 %v804, %v939
        %941 = vmatprep.mubr.f32.mxu0 0.0
        %942 = vmatmul.mubr.f32.gmra.mrb[0].mxu0 %v833
        %v943 = vpop.f32.mrb[0].mxu0
        %v944 = vadd.f32 %v809, %v943
        %v945 = vpop.f32.mrb[0].mxu0
        %v946 = vadd.f32 %v809, %v945
        %947 = vdwg.mxu0
        %v948 = vmax.f32 %v902, 0.0
        %v949 = vmax.f32 %v904, 0.0
        %v950 = vmax.f32 %v908, 0.0
        %v951 = vmax.f32 %v910, 0.0
        %v952 = vmax.f32 %v914, 0.0
        %v953 = vmax.f32 %v916, 0.0
        %v954 = vmax.f32 %v920, 0.0
        %v955 = vmax.f32 %v922, 0.0
        %v956 = vmax.f32 %v926, 0.0
        %v957 = vmax.f32 %v928, 0.0
        %v958 = vmax.f32 %v932, 0.0
        %v959 = vmax.f32 %v934, 0.0
        %v960 = vmax.f32 %v938, 0.0
        %v961 = vmax.f32 %v940, 0.0
        %v962 = vmax.f32 %v944, 0.0
        %v963 = vmax.f32 %v946, 0.0
        %965 = vset.pattern.permute.xlu0 0
        %966 = vperm.xlu0 %965, %v763
        %v967 = vpop.permute.xlu0 %966
        %970 = vset.pattern.permute.xlu0 0
        %971 = vperm.xlu0 %970, %v764
        %v972 = vpop.permute.xlu0 %971
        %975 = vset.pattern.permute.xlu0 0
        %976 = vperm.xlu0 %975, %v765
        %v977 = vpop.permute.xlu0 %976
        %980 = vset.pattern.permute.xlu0 0
        %981 = vperm.xlu0 %980, %v766
        %v982 = vpop.permute.xlu0 %981
        %985 = vset.pattern.permute.xlu0 0
        %986 = vperm.xlu0 %985, %v767
        %v987 = vpop.permute.xlu0 %986
        %990 = vset.pattern.permute.xlu0 0
        %991 = vperm.xlu0 %990, %v768
        %v992 = vpop.permute.xlu0 %991
        %995 = vset.pattern.permute.xlu0 0
        %996 = vperm.xlu0 %995, %v769
        %v997 = vpop.permute.xlu0 %996
        %1000 = vset.pattern.permute.xlu0 0
        %1001 = vperm.xlu0 %1000, %v770
        %v1002 = vpop.permute.xlu0 %1001
        %v1005 = vsel %vm372, %v754, 0
        %v1008 = vsel %vm372, %v755, 0
        %v1011 = vsel %vm372, %v756, 0
        %v1014 = vsel %vm372, %v757, 0
        %v1017 = vsel %vm372, %v758, 0
        %v1020 = vsel %vm372, %v759, 0
        %v1023 = vsel %vm372, %v760, 0
        %v1026 = vsel %vm372, %v761, 0
        %1028 = vmatprep.subr.mxu0 %v949
        %1029 = vmatpush1.msra.mxu0 %v948
        %1030 = vmatprep.subr.mxu0 %v951
        %1031 = vmatpush1.msra.mxu0 %v950
        %1032 = vmatprep.subr.mxu0 %v953
        %1033 = vmatpush1.msra.mxu0 %v952
        %1034 = vmatprep.subr.mxu0 %v955
        %1035 = vmatpush1.msra.mxu0 %v954
        %1036 = vmatprep.subr.mxu0 %v957
        %1037 = vmatpush1.msra.mxu0 %v956
        %1038 = vmatprep.subr.mxu0 %v959
        %1039 = vmatpush1.msra.mxu0 %v958
        %1040 = vmatprep.subr.mxu0 %v961
        %1041 = vmatpush1.msra.mxu0 %v960
        %1042 = vmatprep.subr.mxu0 %v963
        %1043 = vmatpush1.msra.mxu0 %v962
        %1044 = vmatprep.subr.mxu0 0.0
        %1045 = vmatpush1.msra.mxu0 0.0
        %1046 = vmatprep.subr.mxu0 0.0
        %1047 = vmatpush1.msra.mxu0 0.0
        %1048 = vmatprep.subr.mxu0 0.0
        %1049 = vmatpush1.msra.mxu0 0.0
        %1050 = vmatprep.subr.mxu0 0.0
        %1051 = vmatpush1.msra.mxu0 0.0
        %1052 = vmatprep.subr.mxu0 0.0
        %1053 = vmatpush1.msra.mxu0 0.0
        %1054 = vmatprep.subr.mxu0 0.0
        %1055 = vmatpush1.msra.mxu0 0.0
        %1056 = vmatprep.subr.mxu0 0.0
        %1057 = vmatpush1.msra.mxu0 0.0
        %1058 = vmatprep.subr.mxu0 0.0
        %1059 = vmatpush1.msra.mxu0 0.0
        %1060 = vmatprep.subr.mxu0 0.0
        %1061 = vmatpush1.msra.mxu0 0.0
        %1062 = vmatprep.subr.mxu0 0.0
        %1063 = vmatpush1.msra.mxu0 0.0
        %1064 = vmatprep.subr.mxu0 0.0
        %1065 = vmatpush1.msra.mxu0 0.0
        %1066 = vmatprep.subr.mxu0 0.0
        %1067 = vmatpush1.msra.mxu0 0.0
        %1068 = vmatprep.subr.mxu0 0.0
        %1069 = vmatpush1.msra.mxu0 0.0
        %1070 = vmatprep.subr.mxu0 0.0
        %1071 = vmatpush1.msra.mxu0 0.0
        %1072 = vmatprep.subr.mxu0 0.0
        %1073 = vmatpush1.msra.mxu0 0.0
        %1074 = vmatprep.subr.mxu0 0.0
        %1075 = vmatpush1.msra.mxu0 0.0
        %1076 = vmatprep.subr.mxu0 0.0
        %1077 = vmatpush1.msra.mxu0 0.0
        %1078 = vmatprep.subr.mxu0 0.0
        %1079 = vmatpush1.msra.mxu0 0.0
        %1080 = vmatprep.subr.mxu0 0.0
        %1081 = vmatpush1.msra.mxu0 0.0
        %1082 = vmatprep.subr.mxu0 0.0
        %1083 = vmatpush1.msra.mxu0 0.0
        %1084 = vmatprep.subr.mxu0 0.0
        %1085 = vmatpush1.msra.mxu0 0.0
        %1086 = vmatprep.subr.mxu0 0.0
        %1087 = vmatpush1.msra.mxu0 0.0
        %1088 = vmatprep.subr.mxu0 0.0
        %1089 = vmatpush1.msra.mxu0 0.0
        %1090 = vmatprep.subr.mxu0 0.0
        %1091 = vmatpush1.msra.mxu0 0.0
        %1092 = vmatprep.mubr.f32.mxu0 0.0
        %1093 = vmatmul.mubr.f32.gmra.mrb[0].mxu0 %v1005
        %v1094 = vpop.f32.mrb[0].mxu0
        %v1095 = vadd.f32 %v967, %v1094
        %v1096 = vpop.f32.mrb[0].mxu0
        %v1097 = vadd.f32 %v967, %v1096
        %1098 = vmatprep.mubr.f32.mxu0 0.0
        %1099 = vmatmul.mubr.f32.gmra.mrb[0].mxu0 %v1008
        %v1100 = vpop.f32.mrb[0].mxu0
        %v1101 = vadd.f32 %v972, %v1100
        %v1102 = vpop.f32.mrb[0].mxu0
        %v1103 = vadd.f32 %v972, %v1102
        %1104 = vmatprep.mubr.f32.mxu0 0.0
        %1105 = vmatmul.mubr.f32.gmra.mrb[0].mxu0 %v1011
        %v1106 = vpop.f32.mrb[0].mxu0
        %v1107 = vadd.f32 %v977, %v1106
        %v1108 = vpop.f32.mrb[0].mxu0
        %v1109 = vadd.f32 %v977, %v1108
        %1110 = vmatprep.mubr.f32.mxu0 0.0
        %1111 = vmatmul.mubr.f32.gmra.mrb[0].mxu0 %v1014
        %v1112 = vpop.f32.mrb[0].mxu0
        %v1113 = vadd.f32 %v982, %v1112
        %v1114 = vpop.f32.mrb[0].mxu0
        %v1115 = vadd.f32 %v982, %v1114
        %1116 = vmatprep.mubr.f32.mxu0 0.0
        %1117 = vmatmul.mubr.f32.gmra.mrb[0].mxu0 %v1017
        %v1118 = vpop.f32.mrb[0].mxu0
        %v1119 = vadd.f32 %v987, %v1118
        %v1120 = vpop.f32.mrb[0].mxu0
        %v1121 = vadd.f32 %v987, %v1120
        %1122 = vmatprep.mubr.f32.mxu0 0.0
        %1123 = vmatmul.mubr.f32.gmra.mrb[0].mxu0 %v1020
        %v1124 = vpop.f32.mrb[0].mxu0
        %v1125 = vadd.f32 %v992, %v1124
        %v1126 = vpop.f32.mrb[0].mxu0
        %v1127 = vadd.f32 %v992, %v1126
        %1128 = vmatprep.mubr.f32.mxu0 0.0
        %1129 = vmatmul.mubr.f32.gmra.mrb[0].mxu0 %v1023
        %v1130 = vpop.f32.mrb[0].mxu0
        %v1131 = vadd.f32 %v997, %v1130
        %v1132 = vpop.f32.mrb[0].mxu0
        %v1133 = vadd.f32 %v997, %v1132
        %1134 = vmatprep.mubr.f32.mxu0 0.0
        %1135 = vmatmul.mubr.f32.gmra.mrb[0].mxu0 %v1026
        %v1136 = vpop.f32.mrb[0].mxu0
        %v1137 = vadd.f32 %v1002, %v1136
        %v1138 = vpop.f32.mrb[0].mxu0
        %v1139 = vadd.f32 %v1002, %v1138
        %1140 = vdwg.mxu0
        %v1141 = vadd.f32 %v1095, %v719
        %v1142 = vadd.f32 %v1097, %v720
        %v1143 = vadd.f32 %v1101, %v721
        %v1144 = vadd.f32 %v1103, %v722
        %v1145 = vadd.f32 %v1107, %v723
        %v1146 = vadd.f32 %v1109, %v724
        %v1147 = vadd.f32 %v1113, %v725
        %v1148 = vadd.f32 %v1115, %v726
        %v1149 = vadd.f32 %v1119, %v727
        %v1150 = vadd.f32 %v1121, %v728
        %v1151 = vadd.f32 %v1125, %v729
        %v1152 = vadd.f32 %v1127, %v730
        %v1153 = vadd.f32 %v1131, %v731
        %v1154 = vadd.f32 %v1133, %v732
        %v1155 = vadd.f32 %v1137, %v733
        %v1156 = vadd.f32 %v1139, %v734
        %v1157 = vmax.f32 %v1141, 0.0
        %v1158 = vmax.f32 %v1142, 0.0
        %v1159 = vmax.f32 %v1143, 0.0
        %v1160 = vmax.f32 %v1144, 0.0
        %v1161 = vmax.f32 %v1145, 0.0
        %v1162 = vmax.f32 %v1146, 0.0
        %v1163 = vmax.f32 %v1147, 0.0
        %v1164 = vmax.f32 %v1148, 0.0
        %v1165 = vmax.f32 %v1149, 0.0
        %v1166 = vmax.f32 %v1150, 0.0
        %v1167 = vmax.f32 %v1151, 0.0
        %v1168 = vmax.f32 %v1152, 0.0
        %v1169 = vmax.f32 %v1153, 0.0
        %v1170 = vmax.f32 %v1154, 0.0
        %v1171 = vmax.f32 %v1155, 0.0
        %v1172 = vmax.f32 %v1156, 0.0
        %1173 = vst [vmem:[%s272] sm:$0xff] %v1157
        %1174 = vst [vmem:[%s272 + $0x8] sm:$0xff] %v1158
        %1175 = vst [vmem:[%s272 + $0x10] sm:$0xff] %v1159
        %1176 = vst [vmem:[%s272 + $0x18] sm:$0xff] %v1160
        %1177 = vst [vmem:[%s272 + $0x20] sm:$0xff] %v1161
        %1178 = vst [vmem:[%s272 + $0x28] sm:$0xff] %v1162
        %1179 = vst [vmem:[%s272 + $0x30] sm:$0xff] %v1163
        %1180 = vst [vmem:[%s272 + $0x38] sm:$0xff] %v1164
        %1181 = vst [vmem:[%s272 + $0x40] sm:$0xff] %v1165
        %1182 = vst [vmem:[%s272 + $0x48] sm:$0xff] %v1166
        %1183 = vst [vmem:[%s272 + $0x50] sm:$0xff] %v1167
        %1184 = vst [vmem:[%s272 + $0x58] sm:$0xff] %v1168
        %1185 = vst [vmem:[%s272 + $0x60] sm:$0xff] %v1169
        %1186 = vst [vmem:[%s272 + $0x68] sm:$0xff] %v1170
        %1187 = vst [vmem:[%s272 + $0x70] sm:$0xff] %v1171
        %1188 = vst [vmem:[%s272 + $0x78] sm:$0xff] %v1172
        %s1189 = sand.u32 %s155, 1
        %s1190 = scalar_lea.sflag [#allocation4], %s1189
        %s1191 = sand.u32 %s155, 1
        %s1192 = smul.addr %s1191, 128
        %s1193 = scalar_lea.vmem [#allocation7], %s1192
        // Predicated region
        $region49: #{pos_extraction_forward.1} parent=39 // pred_check
          %p1194 = pneg %p165
        $region50: #{pos_extraction_forward.1} parent=39 // pred_check_branch
          %1196 = sbr.rel (%p1194) target = $region52
        $region51: #{pos_extraction_forward.1} parent=39 // pred_region
          %s1197 = smul.u32 2, %s26
          %s1199 = ssub.s32 2048, 2048
          %1200 = vsyncadd %s1190, %s1199
          %s1201 = smul.addr %s25, 16
          %s1202 = sadd.s32 %s1197, %s1201
          %s1203 = smul.addr %s1202, 128
          %s1204 = scalar_lea.hbm %s5, %s1203
          %s1205 = sshll.u32 %s1193, 4
          %s1206 = int_to_ptr.vmem [resolvable:$true] %s1205
          %1211 = dma.vmem_to_hbm [thread:$0]  %s1206, 2048, %s1204, %s1190, 256, 256, 16
        $region52: #{pos_extraction_forward.1} parent=39 // pred_fallthru
          _
      $region40: #{pos_extraction_forward.1} parent=5 // pred_fallthru
        _
      %p1212 = scmp.le.s32.totalorder 2, %s16
      // Predicated region
      $region53: #{pos_extraction_forward.1} parent=5 // pred_check
        %p1213 = pneg %p1212
      $region54: #{pos_extraction_forward.1} parent=5 // pred_check_branch
        %1215 = sbr.rel (%p1213) target = $region56
      $region55: #{pos_extraction_forward.1} parent=5 // pred_region
        %s1216 = ssub.s32 %s16, 2
        // Predicated region
        $region57: #{pos_extraction_forward.1} parent=55 // pred_check
          %p1217 = pneg %p171
        $region58: #{pos_extraction_forward.1} parent=55 // pred_check_branch
          %1219 = sbr.rel (%p1217) target = $region60
        $region59: #{pos_extraction_forward.1} parent=55 // pred_region
          %s1220 = sand.u32 %s156, 1
          %s1221 = scalar_lea.sflag [#allocation4], %s1220
          %s1222 = sand.u32 %s156, 1
          %s1223 = smul.addr %s1222, 128
          %s1224 = scalar_lea.vmem [#allocation7], %s1223
          %1225 = dma.done %s1221, 2048
        $region60: #{pos_extraction_forward.1} parent=55 // pred_fallthru
          _
      $region56: #{pos_extraction_forward.1} parent=5 // pred_fallthru
        _
    $region6: #{pos_extraction_forward.1} parent=1 // loop_footer
      %s20 = sadd.s32 1, %s16
    $region7: #{pos_extraction_forward.1} parent=1 // loop_footer_branch
      %15 = sbr.rel target = $region3
    $region8: #{pos_extraction_forward.1} parent=1 // loop_exit
      _
    %1226 = vsyncpa [#allocation3], 1
    %s1227 = scalar_lea.sflag [#allocation3], 1
    %1228 = vsyncpa %s1227, 1
    %1229 = vsyncpa [#allocation6], 1
    %1230 = vsyncpa [#allocation4], 1
    %s1231 = scalar_lea.sflag [#allocation4], 1
    %1232 = vsyncpa %s1231, 1

</llo_original>
